<compile_context>
chip_gen: v7x
topology: tpu7x:2x2x1
jax: 0.10.0
libtpu: 0.0.40
codegen_flags: <defaults>
</compile_context>

<pallas_src>
import jax
import jax.numpy as jnp
from jax.experimental import pallas as pl
from jax.experimental.pallas import tpu as pltpu


def _add_kernel(a_ref, b_ref, o_ref):
    # Whole-slab elementwise add on the VPU.
    o_ref[...] = a_ref[...] + b_ref[...]


def _pallas_add_impl(x196, x181):
    assert x196.shape == x181.shape and x196.dtype == x181.dtype
    orig_shape = x196.shape
    total = x196.size

    # Flatten to a fully lane-dense 2D slab (last dim a multiple of 128).
    if total % 128 == 0:
        slab = (total // 128, 128)
    else:  # fallback for shapes whose element count isn't lane-divisible
        slab = (1, total)

    a2d = x196.reshape(slab)
    b2d = x181.reshape(slab)

    out2d = pl.pallas_call(
        _add_kernel,
        out_shape=jax.ShapeDtypeStruct(slab, x196.dtype),
        in_specs=[
            pl.BlockSpec(memory_space=pltpu.MemorySpace.VMEM),
            pl.BlockSpec(memory_space=pltpu.MemorySpace.VMEM),
        ],
        out_specs=pl.BlockSpec(memory_space=pltpu.MemorySpace.VMEM),
        input_output_aliases={0: 0},
    )(a2d, b2d)

    return out2d.reshape(orig_shape)


# jit so the (free, contiguous) reshapes fuse away around the custom call.
pallas_add = jax.jit(_pallas_add_impl)


if __name__ == "__main__":
    key = jax.random.PRNGKey(0)
    k1, k2 = jax.random.split(key)
    # Shapes implied by the module's forward: [1, 96, 14, 14]
    x196 = jax.random.normal(k1, (1, 96, 14, 14), dtype=jnp.float32)
    x181 = jax.random.normal(k2, (1, 96, 14, 14), dtype=jnp.float32)

    out = pallas_add(x196, x181)
    jax.block_until_ready(out)

    # Correctness check vs plain JAX reference.
    ref = x196 + x181
    assert out.shape == ref.shape
    assert jnp.allclose(out, ref, atol=1e-6), "mismatch vs reference add"

    print("KERNEL_OK")
</pallas_src>

<mosaic_0001>
module attributes {stable_mosaic.version = 11 : i64} {
  func.func @_add_kernel(%arg0: memref<147x128xf32, #tpu.memory_space<vmem>>, %arg1: memref<147x128xf32, #tpu.memory_space<vmem>>, %arg2: memref<147x128xf32, #tpu.memory_space<vmem>>) attributes {dimension_semantics = [], scalar_prefetch = 0 : i64, scratch_operands = 0 : i64, tpu.core_type = #tpu.core_type<tc>} {
    %c0 = arith.constant 0 : index
    %c0_0 = arith.constant 0 : index
    %0 = vector.load %arg0[%c0, %c0_0] : memref<147x128xf32, #tpu.memory_space<vmem>>, vector<147x128xf32>
    %c0_1 = arith.constant 0 : index
    %c0_2 = arith.constant 0 : index
    %1 = vector.load %arg1[%c0_1, %c0_2] : memref<147x128xf32, #tpu.memory_space<vmem>>, vector<147x128xf32>
    %2 = arith.addf %0, %1 : vector<147x128xf32>
    %c0_3 = arith.constant 0 : index
    %c0_4 = arith.constant 0 : index
    %3 = vector.load %arg2[%c0_3, %c0_4] : memref<147x128xf32, #tpu.memory_space<vmem>>, vector<147x128xf32>
    tpu.vector_store %arg2[%c0_3, %c0_4], %2 {strides = array<i32>} : memref<147x128xf32, #tpu.memory_space<vmem>>, vector<147x128xf32>,
    return
  }
}

</mosaic_0001>

<llo_original>
// kernel: _pallas_add_impl.1
$region0: #{_pallas_add_impl.1}
  #allocation0 [shape = 'u32[]', space=smem, size = 0x4, offset = 0x4, fixed_abs, tag = 'smem constant byte address 0x4 - core index']
  #allocation1 [shape = 'u32[144,128]{1,0:T(1,128)}', space=vmem, size = 0x12000, scoped, tag = 'internal scratch']
  %s0 = inlined_call_operand.vmem [shape: f32[147,128], index: 0, kind: input, shape index: {}, may-alias: {0,2}]
  %s1 = inlined_call_operand.vmem [shape: f32[147,128], index: 1, kind: input, shape index: {}]
  %s2 = inlined_call_operand.vmem [shape: f32[147,128], index: 2, kind: output, shape index: {}, may-alias: {0,2}]
  %s3 = sld [smem:[#allocation0]]
  $region18: #{_pallas_add_impl.1} parent=0
    _
  %s5 = ssub.s32 1, %s3
  %s6 = scalar_select 0, %s5, %s3
  // Predicated region
  $region2: #{_pallas_add_impl.1} parent=0 // pred_check
    _
  $region3: #{_pallas_add_impl.1} parent=0 // pred_check_branch
    %8 = sbr.rel (0) target = $region5
  $region4: #{_pallas_add_impl.1} parent=0 // pred_region
    _
  $region5: #{_pallas_add_impl.1} parent=0 // pred_fallthru
    _
  // Predicated region
  $region6: #{_pallas_add_impl.1} parent=0 // pred_check
    _
  $region7: #{_pallas_add_impl.1} parent=0 // pred_check_branch
    %10 = sbr.rel (0) target = $region9
  $region8: #{_pallas_add_impl.1} parent=0 // pred_region
    _
  $region9: #{_pallas_add_impl.1} parent=0 // pred_fallthru
    _
  %v11 = vld [vmem:[%s0] sm:$0xff]
  %v12 = vld [vmem:[%s0 + $0x8] sm:$0xff]
  %v13 = vld [vmem:[%s0 + $0x10] sm:$0xff]
  %v14 = vld [vmem:[%s0 + $0x18] sm:$0xff]
  %v15 = vld [vmem:[%s0 + $0x20] sm:$0xff]
  %v16 = vld [vmem:[%s0 + $0x28] sm:$0xff]
  %v17 = vld [vmem:[%s0 + $0x30] sm:$0xff]
  %v18 = vld [vmem:[%s0 + $0x38] sm:$0xff]
  %v19 = vld [vmem:[%s0 + $0x40] sm:$0xff]
  %v20 = vld [vmem:[%s0 + $0x48] sm:$0xff]
  %v21 = vld [vmem:[%s0 + $0x50] sm:$0xff]
  %v22 = vld [vmem:[%s0 + $0x58] sm:$0xff]
  %v23 = vld [vmem:[%s0 + $0x60] sm:$0xff]
  %v24 = vld [vmem:[%s0 + $0x68] sm:$0xff]
  %v25 = vld [vmem:[%s0 + $0x70] sm:$0xff]
  %v26 = vld [vmem:[%s0 + $0x78] sm:$0xff]
  %v27 = vld [vmem:[%s0 + $0x80] sm:$0xff]
  %v28 = vld [vmem:[%s0 + $0x88] sm:$0xff]
  %v29 = vld [vmem:[%s0 + $0x90] sm:$0x7]
  %v30 = vld [vmem:[%s1] sm:$0xff]
  %v31 = vld [vmem:[%s1 + $0x8] sm:$0xff]
  %v32 = vld [vmem:[%s1 + $0x10] sm:$0xff]
  %v33 = vld [vmem:[%s1 + $0x18] sm:$0xff]
  %v34 = vld [vmem:[%s1 + $0x20] sm:$0xff]
  %v35 = vld [vmem:[%s1 + $0x28] sm:$0xff]
  %v36 = vld [vmem:[%s1 + $0x30] sm:$0xff]
  %v37 = vld [vmem:[%s1 + $0x38] sm:$0xff]
  %v38 = vld [vmem:[%s1 + $0x40] sm:$0xff]
  %v39 = vld [vmem:[%s1 + $0x48] sm:$0xff]
  %v40 = vld [vmem:[%s1 + $0x50] sm:$0xff]
  %v41 = vld [vmem:[%s1 + $0x58] sm:$0xff]
  %v42 = vld [vmem:[%s1 + $0x60] sm:$0xff]
  %v43 = vld [vmem:[%s1 + $0x68] sm:$0xff]
  %v44 = vld [vmem:[%s1 + $0x70] sm:$0xff]
  %v45 = vld [vmem:[%s1 + $0x78] sm:$0xff]
  %v46 = vld [vmem:[%s1 + $0x80] sm:$0xff]
  %v47 = vld [vmem:[%s1 + $0x88] sm:$0xff]
  %v48 = vld [vmem:[%s1 + $0x90] sm:$0x7]
  %v49 = vadd.f32 %v11, %v30
  %v50 = vadd.f32 %v12, %v31
  %v51 = vadd.f32 %v13, %v32
  %v52 = vadd.f32 %v14, %v33
  %v53 = vadd.f32 %v15, %v34
  %v54 = vadd.f32 %v16, %v35
  %v55 = vadd.f32 %v17, %v36
  %v56 = vadd.f32 %v18, %v37
  %v57 = vadd.f32 %v19, %v38
  %v58 = vadd.f32 %v20, %v39
  %v59 = vadd.f32 %v21, %v40
  %v60 = vadd.f32 %v22, %v41
  %v61 = vadd.f32 %v23, %v42
  %v62 = vadd.f32 %v24, %v43
  %v63 = vadd.f32 %v25, %v44
  %v64 = vadd.f32 %v26, %v45
  %v65 = vadd.f32 %v27, %v46
  %v66 = vadd.f32 %v28, %v47
  %v67 = vadd.f32 %v29, %v48
  %68 = vst [vmem:[%s2] sm:$0xff] %v49
  %69 = vst [vmem:[%s2 + $0x8] sm:$0xff] %v50
  %70 = vst [vmem:[%s2 + $0x10] sm:$0xff] %v51
  %71 = vst [vmem:[%s2 + $0x18] sm:$0xff] %v52
  %72 = vst [vmem:[%s2 + $0x20] sm:$0xff] %v53
  %73 = vst [vmem:[%s2 + $0x28] sm:$0xff] %v54
  %74 = vst [vmem:[%s2 + $0x30] sm:$0xff] %v55
  %75 = vst [vmem:[%s2 + $0x38] sm:$0xff] %v56
  %76 = vst [vmem:[%s2 + $0x40] sm:$0xff] %v57
  %77 = vst [vmem:[%s2 + $0x48] sm:$0xff] %v58
  %78 = vst [vmem:[%s2 + $0x50] sm:$0xff] %v59
  %79 = vst [vmem:[%s2 + $0x58] sm:$0xff] %v60
  %80 = vst [vmem:[%s2 + $0x60] sm:$0xff] %v61
  %81 = vst [vmem:[%s2 + $0x68] sm:$0xff] %v62
  %82 = vst [vmem:[%s2 + $0x70] sm:$0xff] %v63
  %83 = vst [vmem:[%s2 + $0x78] sm:$0xff] %v64
  %84 = vst [vmem:[%s2 + $0x80] sm:$0xff] %v65
  %85 = vst [vmem:[%s2 + $0x88] sm:$0xff] %v66
  %86 = vst [vmem:[%s2 + $0x90] sm:$0x7] %v67
  // Predicated region
  $region10: #{_pallas_add_impl.1} parent=0 // pred_check
    _
  $region11: #{_pallas_add_impl.1} parent=0 // pred_check_branch
    %88 = sbr.rel (0) target = $region13
  $region12: #{_pallas_add_impl.1} parent=0 // pred_region
    _
  $region13: #{_pallas_add_impl.1} parent=0 // pred_fallthru
    _
  // Predicated region
  $region14: #{_pallas_add_impl.1} parent=0 // pred_check
    _
  $region15: #{_pallas_add_impl.1} parent=0 // pred_check_branch
    %90 = sbr.rel (0) target = $region17
  $region16: #{_pallas_add_impl.1} parent=0 // pred_region
    _
  $region17: #{_pallas_add_impl.1} parent=0 // pred_fallthru
    _

</llo_original>
